<compile_context>
chip_gen: v7x
topology: tpu7x:2x2x1
jax: 0.10.0
libtpu: 0.0.40
codegen_flags: <defaults>
</compile_context>

<pallas_src>
import functools

import jax
import jax.numpy as jnp
from jax import lax
from jax.experimental import pallas as pl
from jax.experimental.pallas import tpu as pltpu

LN_EPS = 1e-5
_SQRT_HALF = 0.7071067811865476
_SQRT_2_OVER_PI = 0.7978845608028654

_VMEM_BUDGET = 40 << 20        # conservative across v5e / v6e / v7x
_VMEM_LIMIT_CAP = 56 << 20     # stay under v7x's 64 MiB physical VMEM


def _cdiv(a, b):
    return (a + b - 1) // b


def _round_up(a, m):
    return _cdiv(a, m) * m


def _gelu(x, approximate):
    if approximate:
        # Cheaper (EUP tanh) but deviates from PyTorch's exact-erf nn.GELU().
        return 0.5 * x * (1.0 + jnp.tanh(_SQRT_2_OVER_PI * (x + 0.044715 * x * x * x)))
    # PyTorch nn.GELU() default = exact erf formulation.
    return 0.5 * x * (1.0 + lax.erf(x * _SQRT_HALF))


def processor_kernel(x_ref, w1_ref, w2_ref, params_ref, o_ref, *,
                     approximate_gelu, inv_p):
    x = x_ref[...]                           # [bm, E]   (f32 or bf16)
    params = params_ref[...]                 # [4, Ppad] f32: b1, b2, gamma, beta
    b1, b2 = params[0:1, :], params[1:2, :]
    gamma, beta = params[2:3, :], params[3:4, :]

    # projection: Linear(E -> P); MXU accumulates in f32.
    projected = jnp.dot(x, w1_ref[...], preferred_element_type=jnp.float32) + b1
    # GELU in f32 (v5e VPU/EUP have no bf16 path).
    h = _gelu(projected, approximate_gelu)
    # fc: Linear(P -> P); cast activation to the weight dtype so the MXU sees
    # bf16 x bf16 on the low-precision path, still accumulating in f32.
    h = jnp.dot(h.astype(w2_ref.dtype), w2_ref[...],
                preferred_element_type=jnp.float32) + b2
    # dropout: identity in eval mode.
    # TODO(synk): training-mode dropout (pltpu.prng_random_bits mask) not emitted.
    y = h + projected

    # LayerNorm over the (true) projection dim. Padded columns of y are exactly
    # zero (zero-padded weight columns / biases), so both sums are exact; 1/P
    # uses the true P. var = E[y^2] - mean^2 keeps the two reductions
    # back-to-back instead of reduce -> subtract -> square -> reduce.
    s1 = jnp.sum(y, axis=-1, keepdims=True)
    s2 = jnp.sum(y * y, axis=-1, keepdims=True)
    mean = s1 * inv_p
    var = jnp.maximum(s2 * inv_p - mean * mean, 0.0)
    o_ref[...] = ((y - mean) * lax.rsqrt(var + LN_EPS) * gamma
                  + beta).astype(o_ref.dtype)


def _choose_block_m(B, E, P_pad, mx_bytes, align):
    """Largest row tile (<=512) whose VMEM footprint fits the budget."""
    def footprint(bm):
        resident = 2 * (E * P_pad + P_pad * P_pad) * mx_bytes + 2 * 4 * P_pad * 4
        io = 2 * bm * E * mx_bytes + 2 * bm * P_pad * 4        # double-buffered tiles
        interm = 6 * bm * P_pad * 4                            # projected, h, y, temps
        return resident + io + interm

    bm = min(512, _round_up(B, align))
    while bm > align and footprint(bm) > _VMEM_BUDGET:
        bm = _round_up(bm // 2, align)
    return bm, footprint(bm)


@functools.partial(jax.jit, static_argnames=("use_bf16_matmul", "approximate_gelu"))
def processor_forward(x, w1, b1, w2, b2, gamma, beta, *,
                      use_bf16_matmul=True, approximate_gelu=False):
    B, E = x.shape
    P = w1.shape[1]
    out_dtype = x.dtype                       # capture BEFORE any bf16 cast

    mx_dtype = jnp.bfloat16 if use_bf16_matmul else jnp.float32
    mx_bytes = 2 if use_bf16_matmul else 4
    align = 16 if use_bf16_matmul else 8

    # Lane-dense output: pad P to a multiple of 128 (zero columns keep LN exact).
    P_pad = _round_up(P, 128)
    if P_pad != P:
        w1 = jnp.pad(w1, ((0, 0), (0, P_pad - P)))
        w2 = jnp.pad(w2, ((0, P_pad - P), (0, P_pad - P)))
        b1 = jnp.pad(b1.reshape(1, P), ((0, 0), (0, P_pad - P)))
        b2 = jnp.pad(b2.reshape(1, P), ((0, 0), (0, P_pad - P)))
        gamma = jnp.pad(gamma.reshape(1, P), ((0, 0), (0, P_pad - P)))
        beta = jnp.pad(beta.reshape(1, P), ((0, 0), (0, P_pad - P)))

    block_m, need_bytes = _choose_block_m(B, E, P_pad, mx_bytes, align)
    grid = (_cdiv(B, block_m),)
    B_pad = grid[0] * block_m
    if B_pad != B:
        x = jnp.pad(x, ((0, B_pad - B), (0, 0)))

    # Pack the four (1, P) parameter rows into one resident (4, Ppad) f32 block.
    params = jnp.concatenate(
        [b1.reshape(1, P_pad), b2.reshape(1, P_pad),
         gamma.reshape(1, P_pad), beta.reshape(1, P_pad)], axis=0
    ).astype(jnp.float32)

    x = x.astype(mx_dtype)
    w1 = w1.astype(mx_dtype)
    w2 = w2.astype(mx_dtype)

    vmem_limit = int(min(max(need_bytes + (8 << 20), 16 << 20), _VMEM_LIMIT_CAP))

    kernel = functools.partial(processor_kernel,
                               approximate_gelu=approximate_gelu,
                               inv_p=1.0 / float(P))
    out = pl.pallas_call(
        kernel,
        out_shape=jax.ShapeDtypeStruct((B_pad, P_pad), out_dtype),
        grid_spec=pltpu.PrefetchScalarGridSpec(
            num_scalar_prefetch=0,
            grid=grid,
            in_specs=[
                pl.BlockSpec((block_m, E), lambda i: (i, 0)),     # x row tile
                pl.BlockSpec((E, P_pad), lambda i: (0, 0)),       # W1 (resident)
                pl.BlockSpec((P_pad, P_pad), lambda i: (0, 0)),   # W2 (resident)
                pl.BlockSpec((4, P_pad), lambda i: (0, 0)),       # b1,b2,gamma,beta
            ],
            out_specs=pl.BlockSpec((block_m, P_pad), lambda i: (i, 0)),
        ),
        compiler_params=pltpu.CompilerParams(
            dimension_semantics=("parallel",),
            vmem_limit_bytes=vmem_limit),
    )(x, w1, w2, params)

    if B_pad != B or P_pad != P:
        out = out[:B, :P]
    return out


def reference_forward(x, w1, b1, w2, b2, gamma, beta):
    projected = x @ w1 + b1
    h = _gelu(projected, approximate=False)
    h = h @ w2 + b2
    y = h + projected
    mean = jnp.mean(y, -1, keepdims=True)
    var = jnp.mean((y - mean) ** 2, -1, keepdims=True)
    return (y - mean) / jnp.sqrt(var + LN_EPS) * gamma + beta


if __name__ == "__main__":
    # Small shapes consistent with the module:
    #   batch=8 "CLS" vectors, embedding_dim=32, projection_dim=128.
    B, E, P = 8, 32, 128

    key = jax.random.PRNGKey(0)
    k_x, k_w1, k_b1, k_w2, k_b2 = jax.random.split(key, 5)

    x = jax.random.normal(k_x, (B, E), dtype=jnp.float32)

    # Deterministic synthetic parameter init (uniform, PyTorch-Linear-like scale).
    w1 = jax.random.uniform(k_w1, (E, P), jnp.float32, -1.0, 1.0) / jnp.sqrt(E)
    b1 = jax.random.uniform(k_b1, (1, P), jnp.float32, -1.0, 1.0) / jnp.sqrt(E)
    w2 = jax.random.uniform(k_w2, (P, P), jnp.float32, -1.0, 1.0) / jnp.sqrt(P)
    b2 = jax.random.uniform(k_b2, (1, P), jnp.float32, -1.0, 1.0) / jnp.sqrt(P)
    gamma = jnp.ones((1, P), jnp.float32)   # nn.LayerNorm default weight
    beta = jnp.zeros((1, P), jnp.float32)   # nn.LayerNorm default bias

    ref = reference_forward(x, w1, b1, w2, b2, gamma, beta)

    # f32 path: faithful to the PyTorch module (exact-erf GELU, f32 matmuls).
    out_f32 = jax.block_until_ready(
        processor_forward(x, w1, b1, w2, b2, gamma, beta, use_bf16_matmul=False))
    assert out_f32.shape == (B, P)
    assert jnp.allclose(out_f32, ref, atol=1e-4, rtol=1e-4)

    # Default fast path: bf16 MXU operands, f32 accumulation / GELU / LayerNorm.
    out_bf16 = jax.block_until_ready(
        processor_forward(x, w1, b1, w2, b2, gamma, beta))
    assert out_bf16.shape == (B, P)
    assert jnp.allclose(out_bf16, ref, atol=5e-2, rtol=5e-2)

    print("KERNEL_OK")
</pallas_src>

<mosaic_0001>
module attributes {stable_mosaic.version = 11 : i64} {
  func.func @processor_kernel(%arg0: i32, %arg1: memref<8x32xf32, #tpu.memory_space<vmem>>, %arg2: memref<32x128xf32, #tpu.memory_space<vmem>>, %arg3: memref<128x128xf32, #tpu.memory_space<vmem>>, %arg4: memref<4x128xf32, #tpu.memory_space<vmem>>, %arg5: memref<8x128xf32, #tpu.memory_space<vmem>>) attributes {dimension_semantics = [#tpu.dimension_semantics<parallel>], iteration_bounds = array<i64: 1>, scalar_prefetch = 0 : i64, scratch_operands = 0 : i64, tpu.core_type = #tpu.core_type<tc>, window_params = [{transform_indices = @transform_0, window_bounds = array<i64: 8, 32>}, {pipeline_mode = #tpu.pipeline_mode<synchronous>, transform_indices = @transform_1, window_bounds = array<i64: 32, 128>}, {pipeline_mode = #tpu.pipeline_mode<synchronous>, transform_indices = @transform_2, window_bounds = array<i64: 128, 128>}, {pipeline_mode = #tpu.pipeline_mode<synchronous>, transform_indices = @transform_3, window_bounds = array<i64: 4, 128>}, {transform_indices = @transform_4, window_bounds = array<i64: 8, 128>}]} {
    %c0 = arith.constant 0 : index
    %c0_0 = arith.constant 0 : index
    %0 = vector.load %arg1[%c0, %c0_0] : memref<8x32xf32, #tpu.memory_space<vmem>>, vector<8x32xf32>
    %c0_1 = arith.constant 0 : index
    %c0_2 = arith.constant 0 : index
    %1 = vector.load %arg4[%c0_1, %c0_2] : memref<4x128xf32, #tpu.memory_space<vmem>>, vector<4x128xf32>
    %2 = vector.extract_strided_slice %1 {offsets = [0, 0], sizes = [1, 128], strides = [1, 1]} : vector<4x128xf32> to vector<1x128xf32>
    %3 = vector.extract_strided_slice %1 {offsets = [1, 0], sizes = [1, 128], strides = [1, 1]} : vector<4x128xf32> to vector<1x128xf32>
    %4 = vector.extract_strided_slice %1 {offsets = [2, 0], sizes = [1, 128], strides = [1, 1]} : vector<4x128xf32> to vector<1x128xf32>
    %5 = vector.extract_strided_slice %1 {offsets = [3, 0], sizes = [1, 128], strides = [1, 1]} : vector<4x128xf32> to vector<1x128xf32>
    %c0_3 = arith.constant 0 : index
    %c0_4 = arith.constant 0 : index
    %6 = vector.load %arg2[%c0_3, %c0_4] : memref<32x128xf32, #tpu.memory_space<vmem>>, vector<32x128xf32>
    %cst = arith.constant dense<0.000000e+00> : vector<8x128xf32>
    %7 = tpu.matmul %0, %6, %cst {dimension_numbers = #tpu.dot_dimension_numbers<[1], [0], [0], [1], [0, 0, 1, 1], [], []>} : vector<8x32xf32>, vector<32x128xf32>, vector<8x128xf32> -> vector<8x128xf32>
    %8 = vector.broadcast %2 : vector<1x128xf32> to vector<8x128xf32>
    %9 = arith.addf %7, %8 : vector<8x128xf32>
    %cst_5 = arith.constant 5.000000e-01 : f32
    %10 = vector.broadcast %cst_5 : f32 to vector<8x128xf32>
    %11 = arith.mulf %10, %9 : vector<8x128xf32>
    %cst_6 = arith.constant 0.707106769 : f32
    %12 = vector.broadcast %cst_6 : f32 to vector<8x128xf32>
    %13 = arith.mulf %9, %12 : vector<8x128xf32>
    %14 = math.erf %13 : vector<8x128xf32>
    %cst_7 = arith.constant 1.000000e+00 : f32
    %15 = vector.broadcast %cst_7 : f32 to vector<8x128xf32>
    %16 = arith.addf %15, %14 : vector<8x128xf32>
    %17 = arith.mulf %11, %16 : vector<8x128xf32>
    %c0_8 = arith.constant 0 : index
    %c0_9 = arith.constant 0 : index
    %18 = vector.load %arg3[%c0_8, %c0_9] : memref<128x128xf32, #tpu.memory_space<vmem>>, vector<128x128xf32>
    %cst_10 = arith.constant dense<0.000000e+00> : vector<8x128xf32>
    %19 = tpu.matmul %17, %18, %cst_10 {dimension_numbers = #tpu.dot_dimension_numbers<[1], [0], [0], [1], [0, 0, 1, 1], [], []>} : vector<8x128xf32>, vector<128x128xf32>, vector<8x128xf32> -> vector<8x128xf32>
    %20 = vector.broadcast %3 : vector<1x128xf32> to vector<8x128xf32>
    %21 = arith.addf %19, %20 : vector<8x128xf32>
    %22 = arith.addf %21, %9 : vector<8x128xf32>
    %cst_11 = arith.constant dense<0.000000e+00> : vector<8xf32>
    %23 = vector.multi_reduction <add>, %22, %cst_11 [1] : vector<8x128xf32> to vector<8xf32>
    %24 = vector.shape_cast %23 : vector<8xf32> to vector<8x1xf32>
    %25 = arith.mulf %22, %22 : vector<8x128xf32>
    %cst_12 = arith.constant dense<0.000000e+00> : vector<8xf32>
    %26 = vector.multi_reduction <add>, %25, %cst_12 [1] : vector<8x128xf32> to vector<8xf32>
    %27 = vector.shape_cast %26 : vector<8xf32> to vector<8x1xf32>
    %cst_13 = arith.constant 7.812500e-03 : f32
    %28 = vector.broadcast %cst_13 : f32 to vector<8x1xf32>
    %29 = arith.mulf %24, %28 : vector<8x1xf32>
    %cst_14 = arith.constant 7.812500e-03 : f32
    %30 = vector.broadcast %cst_14 : f32 to vector<8x1xf32>
    %31 = arith.mulf %27, %30 : vector<8x1xf32>
    %32 = arith.mulf %29, %29 : vector<8x1xf32>
    %33 = arith.subf %31, %32 : vector<8x1xf32>
    %cst_15 = arith.constant 0.000000e+00 : f32
    %34 = vector.broadcast %cst_15 : f32 to vector<8x1xf32>
    %35 = arith.maximumf %33, %34 : vector<8x1xf32>
    %36 = vector.broadcast %29 : vector<8x1xf32> to vector<8x128xf32>
    %37 = arith.subf %22, %36 : vector<8x128xf32>
    %cst_16 = arith.constant 9.99999974E-6 : f32
    %38 = vector.broadcast %cst_16 : f32 to vector<8x1xf32>
    %39 = arith.addf %35, %38 : vector<8x1xf32>
    %40 = math.rsqrt %39 : vector<8x1xf32>
    %41 = vector.broadcast %40 : vector<8x1xf32> to vector<8x128xf32>
    %42 = arith.mulf %37, %41 : vector<8x128xf32>
    %43 = vector.broadcast %4 : vector<1x128xf32> to vector<8x128xf32>
    %44 = arith.mulf %42, %43 : vector<8x128xf32>
    %45 = vector.broadcast %5 : vector<1x128xf32> to vector<8x128xf32>
    %46 = arith.addf %44, %45 : vector<8x128xf32>
    %c0_17 = arith.constant 0 : index
    %c0_18 = arith.constant 0 : index
    %47 = vector.load %arg5[%c0_17, %c0_18] : memref<8x128xf32, #tpu.memory_space<vmem>>, vector<8x128xf32>
    tpu.vector_store %arg5[%c0_17, %c0_18], %46 {strides = array<i32>} : memref<8x128xf32, #tpu.memory_space<vmem>>, vector<8x128xf32>,
    return
  }
  func.func @transform_0(%arg0: i32) -> (i32, i32) {
    %c0_i32 = arith.constant 0 : i32
    %c0_i32_0 = arith.constant 0 : i32
    return %arg0, %c0_i32 : i32, i32
  }
  func.func @transform_1(%arg0: i32) -> (i32, i32) {
    %c0_i32 = arith.constant 0 : i32
    %c0_i32_0 = arith.constant 0 : i32
    %c0_i32_1 = arith.constant 0 : i32
    return %c0_i32, %c0_i32_0 : i32, i32
  }
  func.func @transform_2(%arg0: i32) -> (i32, i32) {
    %c0_i32 = arith.constant 0 : i32
    %c0_i32_0 = arith.constant 0 : i32
    %c0_i32_1 = arith.constant 0 : i32
    return %c0_i32, %c0_i32_0 : i32, i32
  }
  func.func @transform_3(%arg0: i32) -> (i32, i32) {
    %c0_i32 = arith.constant 0 : i32
    %c0_i32_0 = arith.constant 0 : i32
    %c0_i32_1 = arith.constant 0 : i32
    return %c0_i32, %c0_i32_0 : i32, i32
  }
  func.func @transform_4(%arg0: i32) -> (i32, i32) {
    %c0_i32 = arith.constant 0 : i32
    %c0_i32_0 = arith.constant 0 : i32
    return %arg0, %c0_i32 : i32, i32
  }
}

</mosaic_0001>

<llo_original>
// kernel: processor_forward.1
$region0: #{processor_forward.1}
  #allocation0 [shape = 'u32[]', space=smem, size = 0x4, offset = 0x4, fixed_abs, tag = 'smem constant byte address 0x4 - core index']
  #allocation1 [shape = 'u32[144,128]{1,0:T(1,128)}', space=vmem, size = 0x12000, scoped, tag = 'internal scratch']
  %s0 = inlined_call_operand.vmem [shape: f32[8,32], index: 0, kind: input, shape index: {}]
  %s1 = inlined_call_operand.hbm [shape: f32[32,128], index: 1, kind: input, shape index: {}]
  %s2 = inlined_call_operand.hbm [shape: f32[128,128], index: 2, kind: input, shape index: {}]
  %s3 = inlined_call_operand.vmem [shape: f32[4,128], index: 3, kind: input, shape index: {}]
  %s4 = inlined_call_operand.hbm [shape: f32[8,128], index: 4, kind: output, shape index: {}]
  %s5 = sld [smem:[#allocation0]]
  $region34: #{processor_forward.1} parent=0
    _
  %s7 = ssub.s32 1, %s5
  %s8 = scalar_select 0, %s7, %s5
  $region1: #{processor_forward.1} parent=0
    #allocation2 [shape = 'u8[16384]{0}', space=vmem, size = 0x4000, scoped, tag = 'input window, operand 1, single buffered']
    #allocation3 [shape = 's32[1]{0}', space=sflag, size = 0x4, scoped, tag = 'scoped memory for processor_forward.1']
    #allocation4 [shape = 's32[1]{0}', space=sflag, size = 0x4, scoped, tag = 'scoped memory for processor_forward.1']
    #allocation5 [shape = 'u8[65536]{0}', space=vmem, size = 0x10000, scoped, tag = 'input window, operand 2, single buffered']
    #allocation6 [shape = 's32[1]{0}', space=sflag, size = 0x4, scoped, tag = 'scoped memory for processor_forward.1']
    #allocation7 [shape = 'u8[4096]{0}', space=vmem, size = 0x1000, scoped, tag = 'output window, operand 0, single buffered']
    %9 = vsyncpa [#allocation3], 0
    %10 = vsyncpa [#allocation6], 0
    %11 = vsyncpa [#allocation4], 0
    // Predicated region
    $region2: #{processor_forward.1} parent=1 // pred_check
      _
    $region3: #{processor_forward.1} parent=1 // pred_check_branch
      %13 = sbr.rel (0) target = $region5
    $region4: #{processor_forward.1} parent=1 // pred_region
      _
    $region5: #{processor_forward.1} parent=1 // pred_fallthru
      _
    // Predicated region
    $region6: #{processor_forward.1} parent=1 // pred_check
      _
    $region7: #{processor_forward.1} parent=1 // pred_check_branch
      %15 = sbr.rel (0) target = $region9
    $region8: #{processor_forward.1} parent=1 // pred_region
      %s17 = ssub.s32 512, 512
      %18 = vsyncadd [#allocation3], %s17
      %s19 = sshll.u32 [#allocation2], 4
      %s20 = int_to_ptr.vmem [resolvable:$true] %s19
      %25 = dma.hbm_to_vmem [thread:$0]  %s1, 512, %s20, [#allocation3], 128, 128, 8
    $region9: #{processor_forward.1} parent=1 // pred_fallthru
      _
    // Predicated region
    $region10: #{processor_forward.1} parent=1 // pred_check
      _
    $region11: #{processor_forward.1} parent=1 // pred_check_branch
      %27 = sbr.rel (0) target = $region13
    $region12: #{processor_forward.1} parent=1 // pred_region
      %s29 = ssub.s32 2048, 2048
      %30 = vsyncadd [#allocation6], %s29
      %s31 = sshll.u32 [#allocation5], 4
      %s32 = int_to_ptr.vmem [resolvable:$true] %s31
      %37 = dma.hbm_to_vmem [thread:$0]  %s2, 2048, %s32, [#allocation6], 128, 128, 8
    $region13: #{processor_forward.1} parent=1 // pred_fallthru
      _
    // Predicated region
    $region14: #{processor_forward.1} parent=1 // pred_check
      _
    $region15: #{processor_forward.1} parent=1 // pred_check_branch
      %39 = sbr.rel (0) target = $region17
    $region16: #{processor_forward.1} parent=1 // pred_region
      _
    $region17: #{processor_forward.1} parent=1 // pred_fallthru
      _
    // Predicated region
    $region18: #{processor_forward.1} parent=1 // pred_check
      _
    $region19: #{processor_forward.1} parent=1 // pred_check_branch
      %41 = sbr.rel (0) target = $region21
    $region20: #{processor_forward.1} parent=1 // pred_region
      %42 = dma.done [#allocation3], 512
    $region21: #{processor_forward.1} parent=1 // pred_fallthru
      _
    // Predicated region
    $region22: #{processor_forward.1} parent=1 // pred_check
      _
    $region23: #{processor_forward.1} parent=1 // pred_check_branch
      %44 = sbr.rel (0) target = $region25
    $region24: #{processor_forward.1} parent=1 // pred_region
      %45 = dma.done [#allocation6], 2048
    $region25: #{processor_forward.1} parent=1 // pred_fallthru
      _
    %v46 = vld [vmem:[%s0] sm:$0xff]
    %v47 = vld [vmem:[%s3] sm:$0xf]
    %v48 = vld [vmem:[#allocation2] sm:$0xff]
    %v49 = vld [vmem:[#allocation2 + $0x8] sm:$0xff]
    %v50 = vld [vmem:[#allocation2 + $0x10] sm:$0xff]
    %v51 = vld [vmem:[#allocation2 + $0x18] sm:$0xff]
    %v52 = vlaneseq
    %v53 = vshrl.u32 %v52, 7
    %v54 = vsub.s32 0, %v53
    %v55 = vrot.slane %v47, %v54
    %vm56 = vcmask 261120
    %v58 = vsel %vm56, %v46, 0
    %60 = vmatprep.subr.mxu0 0.0
    %61 = vmatpush1.msra.mxu0 %v48
    %62 = vmatprep.subr.mxu0 0.0
    %63 = vmatpush1.msra.mxu0 %v49
    %64 = vmatprep.subr.mxu0 0.0
    %65 = vmatpush1.msra.mxu0 %v50
    %66 = vmatprep.subr.mxu0 0.0
    %67 = vmatpush1.msra.mxu0 %v51
    %68 = vmatprep.subr.mxu0 0.0
    %69 = vmatpush1.msra.mxu0 0.0
    %70 = vmatprep.subr.mxu0 0.0
    %71 = vmatpush1.msra.mxu0 0.0
    %72 = vmatprep.subr.mxu0 0.0
    %73 = vmatpush1.msra.mxu0 0.0
    %74 = vmatprep.subr.mxu0 0.0
    %75 = vmatpush1.msra.mxu0 0.0
    %76 = vmatprep.subr.mxu0 0.0
    %77 = vmatpush1.msra.mxu0 0.0
    %78 = vmatprep.subr.mxu0 0.0
    %79 = vmatpush1.msra.mxu0 0.0
    %80 = vmatprep.subr.mxu0 0.0
    %81 = vmatpush1.msra.mxu0 0.0
    %82 = vmatprep.subr.mxu0 0.0
    %83 = vmatpush1.msra.mxu0 0.0
    %84 = vmatprep.subr.mxu0 0.0
    %85 = vmatpush1.msra.mxu0 0.0
    %86 = vmatprep.subr.mxu0 0.0
    %87 = vmatpush1.msra.mxu0 0.0
    %88 = vmatprep.subr.mxu0 0.0
    %89 = vmatpush1.msra.mxu0 0.0
    %90 = vmatprep.subr.mxu0 0.0
    %91 = vmatpush1.msra.mxu0 0.0
    %92 = vmatprep.subr.mxu0 0.0
    %93 = vmatpush1.msra.mxu0 0.0
    %94 = vmatprep.subr.mxu0 0.0
    %95 = vmatpush1.msra.mxu0 0.0
    %96 = vmatprep.subr.mxu0 0.0
    %97 = vmatpush1.msra.mxu0 0.0
    %98 = vmatprep.subr.mxu0 0.0
    %99 = vmatpush1.msra.mxu0 0.0
    %100 = vmatprep.subr.mxu0 0.0
    %101 = vmatpush1.msra.mxu0 0.0
    %102 = vmatprep.subr.mxu0 0.0
    %103 = vmatpush1.msra.mxu0 0.0
    %104 = vmatprep.subr.mxu0 0.0
    %105 = vmatpush1.msra.mxu0 0.0
    %106 = vmatprep.subr.mxu0 0.0
    %107 = vmatpush1.msra.mxu0 0.0
    %108 = vmatprep.subr.mxu0 0.0
    %109 = vmatpush1.msra.mxu0 0.0
    %110 = vmatprep.subr.mxu0 0.0
    %111 = vmatpush1.msra.mxu0 0.0
    %112 = vmatprep.subr.mxu0 0.0
    %113 = vmatpush1.msra.mxu0 0.0
    %114 = vmatprep.subr.mxu0 0.0
    %115 = vmatpush1.msra.mxu0 0.0
    %116 = vmatprep.subr.mxu0 0.0
    %117 = vmatpush1.msra.mxu0 0.0
    %118 = vmatprep.subr.mxu0 0.0
    %119 = vmatpush1.msra.mxu0 0.0
    %120 = vmatprep.subr.mxu0 0.0
    %121 = vmatpush1.msra.mxu0 0.0
    %122 = vmatprep.subr.mxu0 0.0
    %123 = vmatpush1.msra.mxu0 0.0
    %124 = vmatprep.mubr.f32.mxu0 0.0
    %125 = vmatmul.mubr.f32.gmra.mrb[0].mxu0 %v58
    %v126 = vpop.f32.mrb[0].mxu0
    %v127 = vadd.f32 %v55, %v126
    %v128 = vpop.f32.mrb[0].mxu0
    %129 = vdwg.mxu0
    %v130 = vmul.f32 %v127, 0.5
    %v131 = vmul.f32 %v127, 0.70710677
    %v132 = verf.f32.pop %v131
    %v133 = vadd.f32 %v132, 1.0
    %v134 = vmul.f32 %v130, %v133
    %v135 = vld [vmem:[#allocation5] sm:$0xff]
    %v136 = vld [vmem:[#allocation5 + $0x8] sm:$0xff]
    %v137 = vld [vmem:[#allocation5 + $0x10] sm:$0xff]
    %v138 = vld [vmem:[#allocation5 + $0x18] sm:$0xff]
    %v139 = vld [vmem:[#allocation5 + $0x20] sm:$0xff]
    %v140 = vld [vmem:[#allocation5 + $0x28] sm:$0xff]
    %v141 = vld [vmem:[#allocation5 + $0x30] sm:$0xff]
    %v142 = vld [vmem:[#allocation5 + $0x38] sm:$0xff]
    %v143 = vld [vmem:[#allocation5 + $0x40] sm:$0xff]
    %v144 = vld [vmem:[#allocation5 + $0x48] sm:$0xff]
    %v145 = vld [vmem:[#allocation5 + $0x50] sm:$0xff]
    %v146 = vld [vmem:[#allocation5 + $0x58] sm:$0xff]
    %v147 = vld [vmem:[#allocation5 + $0x60] sm:$0xff]
    %v148 = vld [vmem:[#allocation5 + $0x68] sm:$0xff]
    %v149 = vld [vmem:[#allocation5 + $0x70] sm:$0xff]
    %v150 = vld [vmem:[#allocation5 + $0x78] sm:$0xff]
    %v151 = vlaneseq
    %v152 = vshrl.u32 %v151, 7
    %v153 = vsub.s32 1, %v152
    %v154 = vrot.slane %v47, %v153
    %155 = vmatprep.subr.mxu0 0.0
    %156 = vmatpush1.msra.mxu0 %v135
    %157 = vmatprep.subr.mxu0 0.0
    %158 = vmatpush1.msra.mxu0 %v136
    %159 = vmatprep.subr.mxu0 0.0
    %160 = vmatpush1.msra.mxu0 %v137
    %161 = vmatprep.subr.mxu0 0.0
    %162 = vmatpush1.msra.mxu0 %v138
    %163 = vmatprep.subr.mxu0 0.0
    %164 = vmatpush1.msra.mxu0 %v139
    %165 = vmatprep.subr.mxu0 0.0
    %166 = vmatpush1.msra.mxu0 %v140
    %167 = vmatprep.subr.mxu0 0.0
    %168 = vmatpush1.msra.mxu0 %v141
    %169 = vmatprep.subr.mxu0 0.0
    %170 = vmatpush1.msra.mxu0 %v142
    %171 = vmatprep.subr.mxu0 0.0
    %172 = vmatpush1.msra.mxu0 %v143
    %173 = vmatprep.subr.mxu0 0.0
    %174 = vmatpush1.msra.mxu0 %v144
    %175 = vmatprep.subr.mxu0 0.0
    %176 = vmatpush1.msra.mxu0 %v145
    %177 = vmatprep.subr.mxu0 0.0
    %178 = vmatpush1.msra.mxu0 %v146
    %179 = vmatprep.subr.mxu0 0.0
    %180 = vmatpush1.msra.mxu0 %v147
    %181 = vmatprep.subr.mxu0 0.0
    %182 = vmatpush1.msra.mxu0 %v148
    %183 = vmatprep.subr.mxu0 0.0
    %184 = vmatpush1.msra.mxu0 %v149
    %185 = vmatprep.subr.mxu0 0.0
    %186 = vmatpush1.msra.mxu0 %v150
    %187 = vmatprep.subr.mxu0 0.0
    %188 = vmatpush1.msra.mxu0 0.0
    %189 = vmatprep.subr.mxu0 0.0
    %190 = vmatpush1.msra.mxu0 0.0
    %191 = vmatprep.subr.mxu0 0.0
    %192 = vmatpush1.msra.mxu0 0.0
    %193 = vmatprep.subr.mxu0 0.0
    %194 = vmatpush1.msra.mxu0 0.0
    %195 = vmatprep.subr.mxu0 0.0
    %196 = vmatpush1.msra.mxu0 0.0
    %197 = vmatprep.subr.mxu0 0.0
    %198 = vmatpush1.msra.mxu0 0.0
    %199 = vmatprep.subr.mxu0 0.0
    %200 = vmatpush1.msra.mxu0 0.0
    %201 = vmatprep.subr.mxu0 0.0
    %202 = vmatpush1.msra.mxu0 0.0
    %203 = vmatprep.subr.mxu0 0.0
    %204 = vmatpush1.msra.mxu0 0.0
    %205 = vmatprep.subr.mxu0 0.0
    %206 = vmatpush1.msra.mxu0 0.0
    %207 = vmatprep.subr.mxu0 0.0
    %208 = vmatpush1.msra.mxu0 0.0
    %209 = vmatprep.subr.mxu0 0.0
    %210 = vmatpush1.msra.mxu0 0.0
    %211 = vmatprep.subr.mxu0 0.0
    %212 = vmatpush1.msra.mxu0 0.0
    %213 = vmatprep.subr.mxu0 0.0
    %214 = vmatpush1.msra.mxu0 0.0
    %215 = vmatprep.subr.mxu0 0.0
    %216 = vmatpush1.msra.mxu0 0.0
    %217 = vmatprep.subr.mxu0 0.0
    %218 = vmatpush1.msra.mxu0 0.0
    %219 = vmatprep.mubr.f32.mxu0 0.0
    %220 = vmatmul.mubr.f32.gmra.mrb[0].mxu0 %v134
    %v221 = vpop.f32.mrb[0].mxu0
    %v222 = vadd.f32 %v154, %v221
    %v223 = vpop.f32.mrb[0].mxu0
    %224 = vdwg.mxu0
    %v225 = vadd.f32 %v222, %v127
    %226 = vadd.xlane.f32.xlu0 %v225
    %v227 = vpop.xlane.xlu0 %226
    %v228 = vmul.f32 %v225, %v225
    %229 = vadd.xlane.f32.xlu0 %v228
    %v230 = vpop.xlane.xlu0 %229
    %v231 = vmul.f32 %v227, 0.0078125
    %v232 = vmul.f32 %v230, 0.0078125
    %v233 = vmul.f32 %v231, %v231
    %v234 = vsub.f32 %v232, %v233
    %v235 = vmax.f32 %v234, 0.0
    %v236 = vsub.f32 %v225, %v231
    %v237 = vadd.f32 %v235, 1e-05
    %v238 = vrsqrt.pop %v237
    %v239 = vmul.f32 %v236, %v238
    %v240 = vlaneseq
    %v241 = vshrl.u32 %v240, 7
    %v242 = vsub.s32 2, %v241
    %v243 = vrot.slane %v47, %v242
    %v244 = vmul.f32 %v239, %v243
    %v245 = vlaneseq
    %v246 = vshrl.u32 %v245, 7
    %v247 = vsub.s32 3, %v246
    %v248 = vrot.slane %v47, %v247
    %v249 = vadd.f32 %v244, %v248
    %250 = vst [vmem:[#allocation7] sm:$0xff] %v249
    // Predicated region
    $region26: #{processor_forward.1} parent=1 // pred_check
      _
    $region27: #{processor_forward.1} parent=1 // pred_check_branch
      %252 = sbr.rel (0) target = $region29
    $region28: #{processor_forward.1} parent=1 // pred_region
      %s254 = ssub.s32 128, 128
      %255 = vsyncadd [#allocation4], %s254
      %s257 = sshll.u32 [#allocation7], 4
      %s258 = int_to_ptr.vmem [resolvable:$true] %s257
      %260 = dma.vmem_to_hbm [thread:$0]  %s258, 128, %s4, [#allocation4]
    $region29: #{processor_forward.1} parent=1 // pred_fallthru
      _
    // Predicated region
    $region30: #{processor_forward.1} parent=1 // pred_check
      _
    $region31: #{processor_forward.1} parent=1 // pred_check_branch
      %262 = sbr.rel (0) target = $region33
    $region32: #{processor_forward.1} parent=1 // pred_region
      %263 = dma.done [#allocation4], 128
    $region33: #{processor_forward.1} parent=1 // pred_fallthru
      _
    %264 = vsyncpa [#allocation3], 1
    %265 = vsyncpa [#allocation6], 1
    %266 = vsyncpa [#allocation4], 1

</llo_original>
